<compile_context>
chip_gen: v5e
topology: v5e:2x2
jax: 0.10.0
libtpu: 0.0.40
codegen_flags: <defaults>
</compile_context>

<pallas_src>
import functools

import jax
import jax.numpy as jnp
from jax.experimental import pallas as pl
from jax.experimental.pallas import tpu as pltpu


def _round_up(a: int, m: int) -> int:
    return ((a + m - 1) // m) * m


def _td_estimate_kernel(
    obs_ref,     # VMEM (TNP, D*p)   packed obs tile (original dtype)
    nobs_ref,    # VMEM (TNP, D*p)   packed next-obs tile
    rd_ref,      # VMEM (2, TNP, p)  [reward; done] packed, f32
    w1bd_ref,    # VMEM (D*p, H*p)   block-diagonal W1 (resident across grid)
    b1t_ref,     # VMEM (1, H*p)     b1 tiled p times
    w2bd_ref,    # VMEM (H*p, p)     block-diagonal w2
    b2_ref,      # SMEM (1,)         b2 scalar
    out_ref,     # VMEM (2, TNP, p)  out: [state_value; advantage]
    *,
    gamma: float,
):
    w1bd = w1bd_ref[...]
    b1t = b1t_ref[...]
    w2bd = w2bd_ref[...]
    b2 = b2_ref[0]

    def value_net(x):
        # Layer 1: dense MXU GEMM, K = D*p, N = H*p (fully occupied at p=8, D=16, H=32).
        h = jnp.dot(x, w1bd, preferred_element_type=jnp.float32)
        h = jnp.maximum(h + b1t, 0.0)
        # Layer 2: small MXU GEMM against the block-structured w2 -> (TNP, p).
        return jnp.dot(h, w2bd, preferred_element_type=jnp.float32) + b2

    value = value_net(obs_ref[...])        # (TNP, p)  value_network(obs)
    next_value = value_net(nobs_ref[...])  # (TNP, p)  value_network(next_obs)

    reward = rd_ref[0]                     # (TNP, p)
    not_done = 1.0 - rd_ref[1]             # (TNP, p)
    adv = reward + gamma * not_done * next_value - value

    out_ref[0] = value.astype(out_ref.dtype)
    out_ref[1] = adv.astype(out_ref.dtype)


def td_estimate(obs, next_obs, reward, done, params, gamma, *,
                average_rewards=False, block_rows=8192):
    """Pallas TDEstimate forward.

    obs, next_obs : (B, T, D)
    reward        : (B, T, 1)
    done          : (B, T, 1)  (bool or float)
    params        : (w1 [D,H], b1 [H], w2 [H,1], b2 [1])
    gamma         : python float (registered buffer -> compile-time constant)
    Returns (state_value, advantage, reward_out), each (B, T, 1).
    """
    w1, b1, w2, b2 = params
    B, T, D = obs.shape
    N = B * T
    H = w1.shape[1]

    compute_dtype = obs.dtype
    rew = reward.reshape(N).astype(jnp.float32)
    done_f = done.reshape(N).astype(jnp.float32)

    # Reward standardization hoisted out of the kernel (global reduction over a tiny
    # N*4B vector). torch uses unbiased std; for N == 1 torch's std is NaN and
    # clamp_min(NaN) stays NaN -- jnp.maximum propagates NaN, so behavior matches.
    if average_rewards:
        mean = jnp.mean(rew)
        std = jnp.maximum(jnp.std(rew, ddof=1), 1e-4)
        rew = (rew - mean) / std
    rew_out = rew  # the module writes the (possibly standardized) reward back

    # Row packing factor: pack p consecutive rows into one lane-dense packed row via a
    # FREE contiguous reshape (N, D) -> (N/p, D*p). p=8 with D=16 gives 128 lanes.
    p = 1
    for cand in (8, 4, 2):
        if N % cand == 0:
            p = cand
            break
    n_p = N // p
    Dp, Hp = D * p, H * p

    obs2 = obs.reshape(n_p, Dp)
    nobs2 = next_obs.reshape(n_p, Dp).astype(compute_dtype)

    # Coalesce reward/done into one stacked input (single small DMA per grid step).
    rd = jnp.stack([rew.reshape(n_p, p), done_f.reshape(n_p, p)], axis=0)  # (2, n_p, p)

    # Block-diagonal weight replicas (built host-side once; tiny).
    w1bd = jax.scipy.linalg.block_diag(*([w1] * p)).astype(compute_dtype)   # (Dp, Hp)
    b1t = jnp.tile(b1, p).reshape(1, Hp).astype(jnp.float32)                # (1, Hp)
    w2bd = jax.scipy.linalg.block_diag(*([w2] * p)).astype(jnp.float32)     # (Hp, p)
    b2s = b2.reshape(1).astype(jnp.float32)                                 # (1,) SMEM

    # Packed-row tile: block_rows original rows per tile; no padding of obs -- the
    # ragged last tile is handled by Pallas partial-block masking.
    tn_p = max(8, block_rows // p)
    tn_p = min(_round_up(tn_p, 8), _round_up(n_p, 8))
    grid = (pl.cdiv(n_p, tn_p),)

    kernel = functools.partial(_td_estimate_kernel, gamma=float(gamma))

    obs_spec = pl.BlockSpec((tn_p, Dp), lambda i: (i, 0))
    rd_spec = pl.BlockSpec((2, tn_p, p), lambda i: (0, i, 0))

    out = pl.pallas_call(
        kernel,
        grid=grid,
        out_shape=jax.ShapeDtypeStruct((2, n_p, p), jnp.float32),
        in_specs=[
            obs_spec,                                   # packed obs tiles
            obs_spec,                                   # packed next_obs tiles
            rd_spec,                                    # stacked reward/done
            pl.BlockSpec((Dp, Hp), lambda i: (0, 0)),   # block-diag W1 (resident)
            pl.BlockSpec((1, Hp), lambda i: (0, 0)),    # tiled b1
            pl.BlockSpec((Hp, p), lambda i: (0, 0)),    # block-diag w2
            pl.BlockSpec(memory_space=pltpu.MemorySpace.SMEM),  # b2 scalar
        ],
        out_specs=pl.BlockSpec((2, tn_p, p), lambda i: (0, i, 0)),
        compiler_params=pltpu.CompilerParams(
            dimension_semantics=("parallel",),     # megacore sharding where available
            vmem_limit_bytes=40 * 1024 * 1024,     # headroom; stays under v7x 64 MiB
        ),
    )(obs2, nobs2, rd, w1bd, b1t, w2bd, b2s)

    value = out[0].reshape(B, T, 1)
    adv = out[1].reshape(B, T, 1)
    return value, adv, rew_out.reshape(B, T, 1)


def _reference(obs, next_obs, reward, done, params, gamma, *, average_rewards=False):
    w1, b1, w2, b2 = params
    B, T, D = obs.shape
    N = B * T

    def vnet(x):
        h = jnp.maximum(x @ w1.astype(jnp.float32) + b1.reshape(1, -1), 0.0)
        return h @ w2 + b2.reshape(1, 1)

    value = vnet(obs.reshape(N, D).astype(jnp.float32))
    next_value = vnet(next_obs.reshape(N, D).astype(jnp.float32))
    r = reward.reshape(N, 1).astype(jnp.float32)
    if average_rewards:
        r = (r - r.mean()) / jnp.maximum(r.std(ddof=1), 1e-4)
    nd = 1.0 - done.reshape(N, 1).astype(jnp.float32)
    adv = r + gamma * nd * next_value - value
    return value.reshape(B, T, 1), adv.reshape(B, T, 1), r.reshape(B, T, 1)


def _run_case(key, B, T, D, H, gamma, block_rows):
    k_obs, k_nobs, k_rew, k_done, k_w1, k_b1, k_w2, k_b2 = jax.random.split(key, 8)
    obs = jax.random.normal(k_obs, (B, T, D), dtype=jnp.float32)
    next_obs = jax.random.normal(k_nobs, (B, T, D), dtype=jnp.float32)
    reward = jax.random.normal(k_rew, (B, T, 1), dtype=jnp.float32)
    done = jax.random.bernoulli(k_done, 0.2, (B, T, 1))

    w1 = 0.1 * jax.random.normal(k_w1, (D, H), dtype=jnp.float32)
    b1 = 0.01 * jax.random.normal(k_b1, (H,), dtype=jnp.float32)
    w2 = 0.1 * jax.random.normal(k_w2, (H, 1), dtype=jnp.float32)
    b2 = 0.01 * jax.random.normal(k_b2, (1,), dtype=jnp.float32)
    params = (w1, b1, w2, b2)

    ok = True
    for avg in (False, True):
        value, adv, rew_out = td_estimate(
            obs, next_obs, reward, done, params, gamma,
            average_rewards=avg, block_rows=block_rows)
        jax.block_until_ready(adv)
        v_ref, a_ref, r_ref = _reference(
            obs, next_obs, reward, done, params, gamma, average_rewards=avg)
        ok &= bool(jnp.allclose(value, v_ref, atol=1e-4, rtol=1e-4))
        ok &= bool(jnp.allclose(adv, a_ref, atol=1e-4, rtol=1e-4))
        ok &= bool(jnp.allclose(rew_out, r_ref, atol=1e-4, rtol=1e-4))
    return ok


if __name__ == "__main__":
    key = jax.random.PRNGKey(0)
    k1, k2 = jax.random.split(key, 2)
    gamma = 0.99

    ok = True
    # Small canonical case: N=128 -> p=8 packing, fully lane-dense (Dp=128), single tile.
    ok &= _run_case(k1, B=2, T=64, D=16, H=32, gamma=gamma, block_rows=8192)
    # Multi-tile + ragged case: N=300 -> p=4 packing, 75 packed rows, tile=16,
    # grid=cdiv(75,16)=5 with a masked partial last block (no obs padding anywhere).
    ok &= _run_case(k2, B=3, T=100, D=16, H=32, gamma=gamma, block_rows=64)

    # TODO(synk): gradient_mode / detach semantics and TensorDict get/set plumbing have
    # no Pallas equivalent; kernel returns (state_value, advantage, reward) arrays.
    if ok:
        print("KERNEL_OK")
    else:
        print("KERNEL_MISMATCH")
</pallas_src>

<mosaic_0001>
module attributes {stable_mosaic.version = 11 : i64} {
  func.func @_td_estimate_kernel(%arg0: i32, %arg1: memref<16x128xf32, #tpu.memory_space<vmem>>, %arg2: memref<16x128xf32, #tpu.memory_space<vmem>>, %arg3: memref<2x16x8xf32, #tpu.memory_space<vmem>>, %arg4: memref<128x256xf32, #tpu.memory_space<vmem>>, %arg5: memref<1x256xf32, #tpu.memory_space<vmem>>, %arg6: memref<256x8xf32, #tpu.memory_space<vmem>>, %arg7: memref<1xf32, #tpu.memory_space<smem>>, %arg8: memref<2x16x8xf32, #tpu.memory_space<vmem>>) attributes {dimension_semantics = [#tpu.dimension_semantics<parallel>], iteration_bounds = array<i64: 1>, scalar_prefetch = 0 : i64, scratch_operands = 0 : i64, tpu.core_type = #tpu.core_type<tc>, window_params = [{transform_indices = @transform_0, window_bounds = array<i64: 16, 128>}, {transform_indices = @transform_1, window_bounds = array<i64: 16, 128>}, {transform_indices = @transform_2, window_bounds = array<i64: 2, 16, 8>}, {pipeline_mode = #tpu.pipeline_mode<synchronous>, transform_indices = @transform_3, window_bounds = array<i64: 128, 256>}, {pipeline_mode = #tpu.pipeline_mode<synchronous>, transform_indices = @transform_4, window_bounds = array<i64: 1, 256>}, {pipeline_mode = #tpu.pipeline_mode<synchronous>, transform_indices = @transform_5, window_bounds = array<i64: 256, 8>}, {transform_indices = @transform_6, window_bounds = array<i64: 1>}, {transform_indices = @transform_7, window_bounds = array<i64: 2, 16, 8>}]} {
    %c0 = arith.constant 0 : index
    %c0_0 = arith.constant 0 : index
    %0 = vector.load %arg4[%c0, %c0_0] : memref<128x256xf32, #tpu.memory_space<vmem>>, vector<128x256xf32>
    %c0_1 = arith.constant 0 : index
    %c0_2 = arith.constant 0 : index
    %1 = vector.load %arg5[%c0_1, %c0_2] : memref<1x256xf32, #tpu.memory_space<vmem>>, vector<1x256xf32>
    %c0_3 = arith.constant 0 : index
    %c0_4 = arith.constant 0 : index
    %2 = vector.load %arg6[%c0_3, %c0_4] : memref<256x8xf32, #tpu.memory_space<vmem>>, vector<256x8xf32>
    %c0_5 = arith.constant 0 : index
    %3 = memref.load %arg7[%c0_5] : memref<1xf32, #tpu.memory_space<smem>>
    %c0_6 = arith.constant 0 : index
    %c0_7 = arith.constant 0 : index
    %4 = vector.load %arg1[%c0_6, %c0_7] : memref<16x128xf32, #tpu.memory_space<vmem>>, vector<16x128xf32>
    %cst = arith.constant dense<0.000000e+00> : vector<16x256xf32>
    %5 = tpu.matmul %4, %0, %cst {dimension_numbers = #tpu.dot_dimension_numbers<[1], [0], [0], [1], [0, 0, 1, 1], [], []>} : vector<16x128xf32>, vector<128x256xf32>, vector<16x256xf32> -> vector<16x256xf32>
    %6 = vector.broadcast %1 : vector<1x256xf32> to vector<16x256xf32>
    %7 = arith.addf %5, %6 : vector<16x256xf32>
    %cst_8 = arith.constant 0.000000e+00 : f32
    %8 = vector.broadcast %cst_8 : f32 to vector<16x256xf32>
    %9 = arith.maximumf %7, %8 : vector<16x256xf32>
    %cst_9 = arith.constant dense<0.000000e+00> : vector<16x8xf32>
    %10 = tpu.matmul %9, %2, %cst_9 {dimension_numbers = #tpu.dot_dimension_numbers<[1], [0], [0], [1], [0, 0, 1, 1], [], []>} : vector<16x256xf32>, vector<256x8xf32>, vector<16x8xf32> -> vector<16x8xf32>
    %11 = vector.broadcast %3 : f32 to vector<16x8xf32>
    %12 = arith.addf %10, %11 : vector<16x8xf32>
    %c0_10 = arith.constant 0 : index
    %c0_11 = arith.constant 0 : index
    %13 = vector.load %arg2[%c0_10, %c0_11] : memref<16x128xf32, #tpu.memory_space<vmem>>, vector<16x128xf32>
    %cst_12 = arith.constant dense<0.000000e+00> : vector<16x256xf32>
    %14 = tpu.matmul %13, %0, %cst_12 {dimension_numbers = #tpu.dot_dimension_numbers<[1], [0], [0], [1], [0, 0, 1, 1], [], []>} : vector<16x128xf32>, vector<128x256xf32>, vector<16x256xf32> -> vector<16x256xf32>
    %15 = vector.broadcast %1 : vector<1x256xf32> to vector<16x256xf32>
    %16 = arith.addf %14, %15 : vector<16x256xf32>
    %cst_13 = arith.constant 0.000000e+00 : f32
    %17 = vector.broadcast %cst_13 : f32 to vector<16x256xf32>
    %18 = arith.maximumf %16, %17 : vector<16x256xf32>
    %cst_14 = arith.constant dense<0.000000e+00> : vector<16x8xf32>
    %19 = tpu.matmul %18, %2, %cst_14 {dimension_numbers = #tpu.dot_dimension_numbers<[1], [0], [0], [1], [0, 0, 1, 1], [], []>} : vector<16x256xf32>, vector<256x8xf32>, vector<16x8xf32> -> vector<16x8xf32>
    %20 = vector.broadcast %3 : f32 to vector<16x8xf32>
    %21 = arith.addf %19, %20 : vector<16x8xf32>
    %c0_15 = arith.constant 0 : index
    %c0_16 = arith.constant 0 : index
    %c0_17 = arith.constant 0 : index
    %22 = vector.load %arg3[%c0_15, %c0_16, %c0_17] : memref<2x16x8xf32, #tpu.memory_space<vmem>>, vector<1x16x8xf32>
    %23 = vector.shape_cast %22 : vector<1x16x8xf32> to vector<16x8xf32>
    %c1 = arith.constant 1 : index
    %c0_18 = arith.constant 0 : index
    %c0_19 = arith.constant 0 : index
    %24 = vector.load %arg3[%c1, %c0_18, %c0_19] : memref<2x16x8xf32, #tpu.memory_space<vmem>>, vector<1x16x8xf32>
    %25 = vector.shape_cast %24 : vector<1x16x8xf32> to vector<16x8xf32>
    %cst_20 = arith.constant 1.000000e+00 : f32
    %26 = vector.broadcast %cst_20 : f32 to vector<16x8xf32>
    %27 = arith.subf %26, %25 : vector<16x8xf32>
    %cst_21 = arith.constant 9.900000e-01 : f32
    %28 = vector.broadcast %cst_21 : f32 to vector<16x8xf32>
    %29 = arith.mulf %28, %27 : vector<16x8xf32>
    %30 = arith.mulf %29, %21 : vector<16x8xf32>
    %31 = arith.addf %23, %30 : vector<16x8xf32>
    %32 = arith.subf %31, %12 : vector<16x8xf32>
    %c0_22 = arith.constant 0 : index
    %c0_23 = arith.constant 0 : index
    %c0_24 = arith.constant 0 : index
    %33 = vector.load %arg8[%c0_22, %c0_23, %c0_24] : memref<2x16x8xf32, #tpu.memory_space<vmem>>, vector<1x16x8xf32>
    %34 = vector.shape_cast %33 : vector<1x16x8xf32> to vector<16x8xf32>
    %35 = vector.shape_cast %12 : vector<16x8xf32> to vector<1x16x8xf32>
    tpu.vector_store %arg8[%c0_22, %c0_23, %c0_24], %35 {strides = array<i32>} : memref<2x16x8xf32, #tpu.memory_space<vmem>>, vector<1x16x8xf32>,
    %c1_25 = arith.constant 1 : index
    %c0_26 = arith.constant 0 : index
    %c0_27 = arith.constant 0 : index
    %36 = vector.load %arg8[%c1_25, %c0_26, %c0_27] : memref<2x16x8xf32, #tpu.memory_space<vmem>>, vector<1x16x8xf32>
    %37 = vector.shape_cast %36 : vector<1x16x8xf32> to vector<16x8xf32>
    %38 = vector.shape_cast %32 : vector<16x8xf32> to vector<1x16x8xf32>
    tpu.vector_store %arg8[%c1_25, %c0_26, %c0_27], %38 {strides = array<i32>} : memref<2x16x8xf32, #tpu.memory_space<vmem>>, vector<1x16x8xf32>,
    return
  }
  func.func @transform_0(%arg0: i32) -> (i32, i32) {
    %c0_i32 = arith.constant 0 : i32
    %c0_i32_0 = arith.constant 0 : i32
    return %arg0, %c0_i32 : i32, i32
  }
  func.func @transform_1(%arg0: i32) -> (i32, i32) {
    %c0_i32 = arith.constant 0 : i32
    %c0_i32_0 = arith.constant 0 : i32
    return %arg0, %c0_i32 : i32, i32
  }
  func.func @transform_2(%arg0: i32) -> (i32, i32, i32) {
    %c0_i32 = arith.constant 0 : i32
    %c0_i32_0 = arith.constant 0 : i32
    %c0_i32_1 = arith.constant 0 : i32
    return %c0_i32, %arg0, %c0_i32_0 : i32, i32, i32
  }
  func.func @transform_3(%arg0: i32) -> (i32, i32) {
    %c0_i32 = arith.constant 0 : i32
    %c0_i32_0 = arith.constant 0 : i32
    %c0_i32_1 = arith.constant 0 : i32
    return %c0_i32, %c0_i32_0 : i32, i32
  }
  func.func @transform_4(%arg0: i32) -> (i32, i32) {
    %c0_i32 = arith.constant 0 : i32
    %c0_i32_0 = arith.constant 0 : i32
    %c0_i32_1 = arith.constant 0 : i32
    return %c0_i32, %c0_i32_0 : i32, i32
  }
  func.func @transform_5(%arg0: i32) -> (i32, i32) {
    %c0_i32 = arith.constant 0 : i32
    %c0_i32_0 = arith.constant 0 : i32
    %c0_i32_1 = arith.constant 0 : i32
    return %c0_i32, %c0_i32_0 : i32, i32
  }
  func.func @transform_6(%arg0: i32) -> i32 {
    %c0_i32 = arith.constant 0 : i32
    %c0_i32_0 = arith.constant 0 : i32
    return %c0_i32 : i32
  }
  func.func @transform_7(%arg0: i32) -> (i32, i32, i32) {
    %c0_i32 = arith.constant 0 : i32
    %c0_i32_0 = arith.constant 0 : i32
    %c0_i32_1 = arith.constant 0 : i32
    return %c0_i32, %arg0, %c0_i32_0 : i32, i32, i32
  }
}

</mosaic_0001>

<llo_original>
// kernel: tpu_custom_call.1
$region0: #{tpu_custom_call.1}
  #allocation0 [shape = 'u32[]', space=smem, size = 0x4, offset = 0x4, fixed_abs, tag = 'smem constant byte address 0x4 - core index']
  #allocation1 [shape = 'u32[72,128]{1,0:T(1,128)}', space=vmem, size = 0x9000, scoped, tag = 'internal scratch']
  #allocation2 [shape = 'f32[1]{0:T(128)S(6)}', space=smem, size = 0x200, scoped, tag = 'scoped memory for tpu_custom_call.1']
  %s0 = inlined_call_operand.vmem [shape: f32[16,128], index: 0, kind: input, shape index: {}]
  %s1 = inlined_call_operand.vmem [shape: f32[16,128], index: 1, kind: input, shape index: {}]
  %s2 = inlined_call_operand.vmem [shape: f32[2,16,8], index: 2, kind: input, shape index: {}]
  %s3 = inlined_call_operand.vmem [shape: f32[128,256], index: 3, kind: input, shape index: {}]
  %s4 = inlined_call_operand.vmem [shape: f32[1,256], index: 4, kind: input, shape index: {}]
  %s5 = inlined_call_operand.vmem [shape: f32[256,8], index: 5, kind: input, shape index: {}]
  %s6 = inlined_call_operand.<no memory space> [shape: f32[1], index: 6, kind: input, shape index: {}]
  %s7 = inlined_call_operand.vmem [shape: f32[2,16,8], index: 7, kind: output, shape index: {}]
  %s8 = sld [smem:[#allocation0]]
  $region38: #{tpu_custom_call.1} parent=0
    _
  %s10 = ssub.s32 1, %s8
  %s11 = scalar_select 0, %s10, %s8
  %12 = sst [smem:[#allocation2]] %s6
  // Predicated region
  $region2: #{tpu_custom_call.1} parent=0 // pred_check
    _
  $region3: #{tpu_custom_call.1} parent=0 // pred_check_branch
    %14 = sbr.rel (0) target = $region5
  $region4: #{tpu_custom_call.1} parent=0 // pred_region
    _
  $region5: #{tpu_custom_call.1} parent=0 // pred_fallthru
    _
  // Predicated region
  $region6: #{tpu_custom_call.1} parent=0 // pred_check
    _
  $region7: #{tpu_custom_call.1} parent=0 // pred_check_branch
    %16 = sbr.rel (0) target = $region9
  $region8: #{tpu_custom_call.1} parent=0 // pred_region
    _
  $region9: #{tpu_custom_call.1} parent=0 // pred_fallthru
    _
  // Predicated region
  $region10: #{tpu_custom_call.1} parent=0 // pred_check
    _
  $region11: #{tpu_custom_call.1} parent=0 // pred_check_branch
    %18 = sbr.rel (0) target = $region13
  $region12: #{tpu_custom_call.1} parent=0 // pred_region
    _
  $region13: #{tpu_custom_call.1} parent=0 // pred_fallthru
    _
  // Predicated region
  $region14: #{tpu_custom_call.1} parent=0 // pred_check
    _
  $region15: #{tpu_custom_call.1} parent=0 // pred_check_branch
    %20 = sbr.rel (0) target = $region17
  $region16: #{tpu_custom_call.1} parent=0 // pred_region
    _
  $region17: #{tpu_custom_call.1} parent=0 // pred_fallthru
    _
  // Predicated region
  $region18: #{tpu_custom_call.1} parent=0 // pred_check
    _
  $region19: #{tpu_custom_call.1} parent=0 // pred_check_branch
    %22 = sbr.rel (0) target = $region21
  $region20: #{tpu_custom_call.1} parent=0 // pred_region
    _
  $region21: #{tpu_custom_call.1} parent=0 // pred_fallthru
    _
  // Predicated region
  $region22: #{tpu_custom_call.1} parent=0 // pred_check
    _
  $region23: #{tpu_custom_call.1} parent=0 // pred_check_branch
    %24 = sbr.rel (0) target = $region25
  $region24: #{tpu_custom_call.1} parent=0 // pred_region
    _
  $region25: #{tpu_custom_call.1} parent=0 // pred_fallthru
    _
  // Predicated region
  $region26: #{tpu_custom_call.1} parent=0 // pred_check
    _
  $region27: #{tpu_custom_call.1} parent=0 // pred_check_branch
    %26 = sbr.rel (0) target = $region29
  $region28: #{tpu_custom_call.1} parent=0 // pred_region
    _
  $region29: #{tpu_custom_call.1} parent=0 // pred_fallthru
    _
  %v27 = vld [vmem:[%s3] sm:$0xff]
  %v28 = vld [vmem:[%s3 + $0x8] sm:$0xff]
  %v29 = vld [vmem:[%s3 + $0x10] sm:$0xff]
  %v30 = vld [vmem:[%s3 + $0x18] sm:$0xff]
  %v31 = vld [vmem:[%s3 + $0x20] sm:$0xff]
  %v32 = vld [vmem:[%s3 + $0x28] sm:$0xff]
  %v33 = vld [vmem:[%s3 + $0x30] sm:$0xff]
  %v34 = vld [vmem:[%s3 + $0x38] sm:$0xff]
  %v35 = vld [vmem:[%s3 + $0x40] sm:$0xff]
  %v36 = vld [vmem:[%s3 + $0x48] sm:$0xff]
  %v37 = vld [vmem:[%s3 + $0x50] sm:$0xff]
  %v38 = vld [vmem:[%s3 + $0x58] sm:$0xff]
  %v39 = vld [vmem:[%s3 + $0x60] sm:$0xff]
  %v40 = vld [vmem:[%s3 + $0x68] sm:$0xff]
  %v41 = vld [vmem:[%s3 + $0x70] sm:$0xff]
  %v42 = vld [vmem:[%s3 + $0x78] sm:$0xff]
  %v43 = vld [vmem:[%s3 + $0x80] sm:$0xff]
  %v44 = vld [vmem:[%s3 + $0x88] sm:$0xff]
  %v45 = vld [vmem:[%s3 + $0x90] sm:$0xff]
  %v46 = vld [vmem:[%s3 + $0x98] sm:$0xff]
  %v47 = vld [vmem:[%s3 + $0xa0] sm:$0xff]
  %v48 = vld [vmem:[%s3 + $0xa8] sm:$0xff]
  %v49 = vld [vmem:[%s3 + $0xb0] sm:$0xff]
  %v50 = vld [vmem:[%s3 + $0xb8] sm:$0xff]
  %v51 = vld [vmem:[%s3 + $0xc0] sm:$0xff]
  %v52 = vld [vmem:[%s3 + $0xc8] sm:$0xff]
  %v53 = vld [vmem:[%s3 + $0xd0] sm:$0xff]
  %v54 = vld [vmem:[%s3 + $0xd8] sm:$0xff]
  %v55 = vld [vmem:[%s3 + $0xe0] sm:$0xff]
  %v56 = vld [vmem:[%s3 + $0xe8] sm:$0xff]
  %v57 = vld [vmem:[%s3 + $0xf0] sm:$0xff]
  %v58 = vld [vmem:[%s3 + $0xf8] sm:$0xff]
  %v59 = vld [vmem:[%s4] sm:$0x3]
  %v60 = vld [vmem:[%s5] sm:$0xff]
  %v61 = vld [vmem:[%s5 + $0x8] sm:$0xff]
  %v62 = vld [vmem:[%s5 + $0x10] sm:$0xff]
  %v63 = vld [vmem:[%s5 + $0x18] sm:$0xff]
  %v64 = vld [vmem:[%s5 + $0x20] sm:$0xff]
  %v65 = vld [vmem:[%s5 + $0x28] sm:$0xff]
  %v66 = vld [vmem:[%s5 + $0x30] sm:$0xff]
  %v67 = vld [vmem:[%s5 + $0x38] sm:$0xff]
  %v68 = vld [vmem:[%s5 + $0x40] sm:$0xff]
  %v69 = vld [vmem:[%s5 + $0x48] sm:$0xff]
  %v70 = vld [vmem:[%s5 + $0x50] sm:$0xff]
  %v71 = vld [vmem:[%s5 + $0x58] sm:$0xff]
  %v72 = vld [vmem:[%s5 + $0x60] sm:$0xff]
  %v73 = vld [vmem:[%s5 + $0x68] sm:$0xff]
  %v74 = vld [vmem:[%s5 + $0x70] sm:$0xff]
  %v75 = vld [vmem:[%s5 + $0x78] sm:$0xff]
  %v76 = vld [vmem:[%s5 + $0x80] sm:$0xff]
  %v77 = vld [vmem:[%s5 + $0x88] sm:$0xff]
  %v78 = vld [vmem:[%s5 + $0x90] sm:$0xff]
  %v79 = vld [vmem:[%s5 + $0x98] sm:$0xff]
  %v80 = vld [vmem:[%s5 + $0xa0] sm:$0xff]
  %v81 = vld [vmem:[%s5 + $0xa8] sm:$0xff]
  %v82 = vld [vmem:[%s5 + $0xb0] sm:$0xff]
  %v83 = vld [vmem:[%s5 + $0xb8] sm:$0xff]
  %v84 = vld [vmem:[%s5 + $0xc0] sm:$0xff]
  %v85 = vld [vmem:[%s5 + $0xc8] sm:$0xff]
  %v86 = vld [vmem:[%s5 + $0xd0] sm:$0xff]
  %v87 = vld [vmem:[%s5 + $0xd8] sm:$0xff]
  %v88 = vld [vmem:[%s5 + $0xe0] sm:$0xff]
  %v89 = vld [vmem:[%s5 + $0xe8] sm:$0xff]
  %v90 = vld [vmem:[%s5 + $0xf0] sm:$0xff]
  %v91 = vld [vmem:[%s5 + $0xf8] sm:$0xff]
  %s92 = sld [smem:[#allocation2]]
  %v93 = vld [vmem:[%s0] sm:$0xff]
  %v94 = vld [vmem:[%s0 + $0x8] sm:$0xff]
  %v96 = vperm.slane %v59, 0
  %v97 = vperm.slane %v59, 1
  %100 = vmatpush.msra.mxu0 %v57
  %101 = vmatpush.msra.mxu0 %v55
  %102 = vmatpush.msra.mxu0 %v53
  %103 = vmatpush.msra.mxu0 %v51
  %104 = vmatpush.msra.mxu0 %v49
  %105 = vmatpush.msra.mxu0 %v47
  %106 = vmatpush.msra.mxu0 %v45
  %107 = vmatpush.msra.mxu0 %v43
  %108 = vmatpush.msra.mxu0 %v41
  %109 = vmatpush.msra.mxu0 %v39
  %110 = vmatpush.msra.mxu0 %v37
  %111 = vmatpush.msra.mxu0 %v35
  %112 = vmatpush.msra.mxu0 %v33
  %113 = vmatpush.msra.mxu0 %v31
  %114 = vmatpush.msra.mxu0 %v29
  %115 = vmatpush.msra.mxu0 %v27
  %116 = vmatmul.f32.gmra.mxu0 %v93
  %v117 = vpop.f32.mrf.mxu0
  %v118 = vadd.f32 %v96, %v117
  %119 = vmatmul.f32.gmra.mxu0 %v94
  %v120 = vpop.f32.mrf.mxu0
  %v121 = vadd.f32 %v96, %v120
  %122 = vdwg.mxu0
  %123 = vmatpush.msra.mxu0 %v58
  %124 = vmatpush.msra.mxu0 %v56
  %125 = vmatpush.msra.mxu0 %v54
  %126 = vmatpush.msra.mxu0 %v52
  %127 = vmatpush.msra.mxu0 %v50
  %128 = vmatpush.msra.mxu0 %v48
  %129 = vmatpush.msra.mxu0 %v46
  %130 = vmatpush.msra.mxu0 %v44
  %131 = vmatpush.msra.mxu0 %v42
  %132 = vmatpush.msra.mxu0 %v40
  %133 = vmatpush.msra.mxu0 %v38
  %134 = vmatpush.msra.mxu0 %v36
  %135 = vmatpush.msra.mxu0 %v34
  %136 = vmatpush.msra.mxu0 %v32
  %137 = vmatpush.msra.mxu0 %v30
  %138 = vmatpush.msra.mxu0 %v28
  %139 = vmatmul.f32.gmra.mxu0 %v93
  %v140 = vpop.f32.mrf.mxu0
  %v141 = vadd.f32 %v97, %v140
  %142 = vmatmul.f32.gmra.mxu0 %v94
  %v143 = vpop.f32.mrf.mxu0
  %v144 = vadd.f32 %v97, %v143
  %145 = vdwg.mxu0
  %v146 = vmax.f32 %v118, 0.0
  %v147 = vmax.f32 %v141, 0.0
  %v148 = vmax.f32 %v121, 0.0
  %v149 = vmax.f32 %v144, 0.0
  %v150 = vstv %s92
  %151 = vmatpush.msra.mxu0 %v75
  %152 = vmatpush.msra.mxu0 %v74
  %153 = vmatpush.msra.mxu0 %v73
  %154 = vmatpush.msra.mxu0 %v72
  %155 = vmatpush.msra.mxu0 %v71
  %156 = vmatpush.msra.mxu0 %v70
  %157 = vmatpush.msra.mxu0 %v69
  %158 = vmatpush.msra.mxu0 %v68
  %159 = vmatpush.msra.mxu0 %v67
  %160 = vmatpush.msra.mxu0 %v66
  %161 = vmatpush.msra.mxu0 %v65
  %162 = vmatpush.msra.mxu0 %v64
  %163 = vmatpush.msra.mxu0 %v63
  %164 = vmatpush.msra.mxu0 %v62
  %165 = vmatpush.msra.mxu0 %v61
  %166 = vmatpush.msra.mxu0 %v60
  %167 = vmatmul.f32.gmra.mxu0 %v146
  %v168 = vpop.f32.mrf.mxu0
  %v169 = vadd.f32 %v150, %v168
  %170 = vmatmul.f32.gmra.mxu0 %v148
  %v171 = vpop.f32.mrf.mxu0
  %v172 = vadd.f32 %v150, %v171
  %173 = vdwg.mxu0
  %174 = vmatpush.msra.mxu0 %v91
  %175 = vmatpush.msra.mxu0 %v90
  %176 = vmatpush.msra.mxu0 %v89
  %177 = vmatpush.msra.mxu0 %v88
  %178 = vmatpush.msra.mxu0 %v87
  %179 = vmatpush.msra.mxu0 %v86
  %180 = vmatpush.msra.mxu0 %v85
  %181 = vmatpush.msra.mxu0 %v84
  %182 = vmatpush.msra.mxu0 %v83
  %183 = vmatpush.msra.mxu0 %v82
  %184 = vmatpush.msra.mxu0 %v81
  %185 = vmatpush.msra.mxu0 %v80
  %186 = vmatpush.msra.mxu0 %v79
  %187 = vmatpush.msra.mxu0 %v78
  %188 = vmatpush.msra.mxu0 %v77
  %189 = vmatpush.msra.mxu0 %v76
  %190 = vmatmul.f32.gmra.mxu0 %v147
  %v191 = vpop.f32.mrf.mxu0
  %v192 = vadd.f32 %v169, %v191
  %193 = vmatmul.f32.gmra.mxu0 %v149
  %v194 = vpop.f32.mrf.mxu0
  %v195 = vadd.f32 %v172, %v194
  %196 = vdwg.mxu0
  %v197 = vld [vmem:[%s1] sm:$0xff]
  %v198 = vld [vmem:[%s1 + $0x8] sm:$0xff]
  %199 = vmatpush.msra.mxu0 %v57
  %200 = vmatpush.msra.mxu0 %v55
  %201 = vmatpush.msra.mxu0 %v53
  %202 = vmatpush.msra.mxu0 %v51
  %203 = vmatpush.msra.mxu0 %v49
  %204 = vmatpush.msra.mxu0 %v47
  %205 = vmatpush.msra.mxu0 %v45
  %206 = vmatpush.msra.mxu0 %v43
  %207 = vmatpush.msra.mxu0 %v41
  %208 = vmatpush.msra.mxu0 %v39
  %209 = vmatpush.msra.mxu0 %v37
  %210 = vmatpush.msra.mxu0 %v35
  %211 = vmatpush.msra.mxu0 %v33
  %212 = vmatpush.msra.mxu0 %v31
  %213 = vmatpush.msra.mxu0 %v29
  %214 = vmatpush.msra.mxu0 %v27
  %215 = vmatmul.f32.gmra.mxu0 %v197
  %v216 = vpop.f32.mrf.mxu0
  %v217 = vadd.f32 %v96, %v216
  %218 = vmatmul.f32.gmra.mxu0 %v198
  %v219 = vpop.f32.mrf.mxu0
  %v220 = vadd.f32 %v96, %v219
  %221 = vdwg.mxu0
  %222 = vmatpush.msra.mxu0 %v58
  %223 = vmatpush.msra.mxu0 %v56
  %224 = vmatpush.msra.mxu0 %v54
  %225 = vmatpush.msra.mxu0 %v52
  %226 = vmatpush.msra.mxu0 %v50
  %227 = vmatpush.msra.mxu0 %v48
  %228 = vmatpush.msra.mxu0 %v46
  %229 = vmatpush.msra.mxu0 %v44
  %230 = vmatpush.msra.mxu0 %v42
  %231 = vmatpush.msra.mxu0 %v40
  %232 = vmatpush.msra.mxu0 %v38
  %233 = vmatpush.msra.mxu0 %v36
  %234 = vmatpush.msra.mxu0 %v34
  %235 = vmatpush.msra.mxu0 %v32
  %236 = vmatpush.msra.mxu0 %v30
  %237 = vmatpush.msra.mxu0 %v28
  %238 = vmatmul.f32.gmra.mxu0 %v197
  %v239 = vpop.f32.mrf.mxu0
  %v240 = vadd.f32 %v97, %v239
  %241 = vmatmul.f32.gmra.mxu0 %v198
  %v242 = vpop.f32.mrf.mxu0
  %v243 = vadd.f32 %v97, %v242
  %244 = vdwg.mxu0
  %v245 = vmax.f32 %v217, 0.0
  %v246 = vmax.f32 %v240, 0.0
  %v247 = vmax.f32 %v220, 0.0
  %v248 = vmax.f32 %v243, 0.0
  %249 = vmatpush.msra.mxu0 %v75
  %250 = vmatpush.msra.mxu0 %v74
  %251 = vmatpush.msra.mxu0 %v73
  %252 = vmatpush.msra.mxu0 %v72
  %253 = vmatpush.msra.mxu0 %v71
  %254 = vmatpush.msra.mxu0 %v70
  %255 = vmatpush.msra.mxu0 %v69
  %256 = vmatpush.msra.mxu0 %v68
  %257 = vmatpush.msra.mxu0 %v67
  %258 = vmatpush.msra.mxu0 %v66
  %259 = vmatpush.msra.mxu0 %v65
  %260 = vmatpush.msra.mxu0 %v64
  %261 = vmatpush.msra.mxu0 %v63
  %262 = vmatpush.msra.mxu0 %v62
  %263 = vmatpush.msra.mxu0 %v61
  %264 = vmatpush.msra.mxu0 %v60
  %265 = vmatmul.f32.gmra.mxu0 %v245
  %v266 = vpop.f32.mrf.mxu0
  %v267 = vadd.f32 %v150, %v266
  %268 = vmatmul.f32.gmra.mxu0 %v247
  %v269 = vpop.f32.mrf.mxu0
  %v270 = vadd.f32 %v150, %v269
  %271 = vdwg.mxu0
  %272 = vmatpush.msra.mxu0 %v91
  %273 = vmatpush.msra.mxu0 %v90
  %274 = vmatpush.msra.mxu0 %v89
  %275 = vmatpush.msra.mxu0 %v88
  %276 = vmatpush.msra.mxu0 %v87
  %277 = vmatpush.msra.mxu0 %v86
  %278 = vmatpush.msra.mxu0 %v85
  %279 = vmatpush.msra.mxu0 %v84
  %280 = vmatpush.msra.mxu0 %v83
  %281 = vmatpush.msra.mxu0 %v82
  %282 = vmatpush.msra.mxu0 %v81
  %283 = vmatpush.msra.mxu0 %v80
  %284 = vmatpush.msra.mxu0 %v79
  %285 = vmatpush.msra.mxu0 %v78
  %286 = vmatpush.msra.mxu0 %v77
  %287 = vmatpush.msra.mxu0 %v76
  %288 = vmatmul.f32.gmra.mxu0 %v246
  %v289 = vpop.f32.mrf.mxu0
  %v290 = vadd.f32 %v267, %v289
  %291 = vmatmul.f32.gmra.mxu0 %v248
  %v292 = vpop.f32.mrf.mxu0
  %v293 = vadd.f32 %v270, %v292
  %294 = vdwg.mxu0
  %v295 = vld [vmem:[%s2] sm:$0xff]
  %v296 = vld [vmem:[%s2 + $0x8] sm:$0xff]
  %s297 = scalar_lea.vmem %s2, 16
  %v298 = vld [vmem:[%s297] sm:$0xff]
  %v299 = vld [vmem:[%s297 + $0x8] sm:$0xff]
  %v300 = vsub.f32 1.0, %v298
  %v301 = vsub.f32 1.0, %v299
  %v302 = vmul.f32 %v300, 0.99
  %v303 = vmul.f32 %v301, 0.99
  %v304 = vmul.f32 %v302, %v290
  %v305 = vmul.f32 %v303, %v293
  %v306 = vadd.f32 %v295, %v304
  %v307 = vadd.f32 %v296, %v305
  %v308 = vsub.f32 %v306, %v192
  %v309 = vsub.f32 %v307, %v195
  %vm310 = vcmask 64512
  %311 = vst.msk [vmem:[%s7] sm:$0xff] %vm310, %v192
  %312 = vst.msk [vmem:[%s7 + $0x8] sm:$0xff] %vm310, %v195
  %s313 = scalar_lea.vmem %s7, 16
  %314 = vst.msk [vmem:[%s313] sm:$0xff] %vm310, %v308
  %315 = vst.msk [vmem:[%s313 + $0x8] sm:$0xff] %vm310, %v309
  // Predicated region
  $region30: #{tpu_custom_call.1} parent=0 // pred_check
    _
  $region31: #{tpu_custom_call.1} parent=0 // pred_check_branch
    %317 = sbr.rel (0) target = $region33
  $region32: #{tpu_custom_call.1} parent=0 // pred_region
    _
  $region33: #{tpu_custom_call.1} parent=0 // pred_fallthru
    _
  // Predicated region
  $region34: #{tpu_custom_call.1} parent=0 // pred_check
    _
  $region35: #{tpu_custom_call.1} parent=0 // pred_check_branch
    %319 = sbr.rel (0) target = $region37
  $region36: #{tpu_custom_call.1} parent=0 // pred_region
    _
  $region37: #{tpu_custom_call.1} parent=0 // pred_fallthru
    _

</llo_original>
